<compile_context>
chip_gen: v6e
topology: v6e:2x2x1
jax: 0.10.0
libtpu: 0.0.40
codegen_flags: <defaults>
</compile_context>

<pallas_src>
import functools

import jax
import jax.numpy as jnp
from jax.experimental import pallas as pl
from jax.experimental.pallas import tpu as pltpu


def _layernorm1d_kernel(x_ref, gain_ref, bias_ref, o_ref, *, eps, n_feat):
    x = x_ref[...].astype(jnp.float32)                        # (tm, N)
    # Single pass: sum and sum-of-squares reduce concurrently (better XLU ILP
    # than mean -> diff -> sum(diff^2), which serializes two lane reductions).
    s = jnp.sum(x, axis=1, keepdims=True)                     # (tm, 1)
    ss = jnp.sum(x * x, axis=1, keepdims=True)                # (tm, 1)
    mean = s * (1.0 / n_feat)
    # unbiased variance (torch.var default): divide by (N - 1)
    var = (ss - s * mean) * (1.0 / (n_feat - 1))
    inv_std = jax.lax.rsqrt(var + eps)                        # EUP, cheap
    g = gain_ref[...].astype(jnp.float32)                     # (1, N)
    b = bias_ref[...].astype(jnp.float32)                     # (1, N)
    out = g * ((x - mean) * inv_std) + b                      # f32 epilogue
    o_ref[...] = out.astype(o_ref.dtype)                      # single cast at store


def _sublane_multiple(itemsize):
    # Sub-32-bit dtypes pack along sublanes: bf16 -> 16 rows, int8/fp8 -> 32.
    if itemsize >= 4:
        return 8
    if itemsize == 2:
        return 16
    return 32


def layernorm1d(x, gain, bias, *, eps=1e-5, block_rows=None):
    """x: (B, N) array; gain/bias: (N,)."""
    B, N = x.shape
    itemsize = jnp.dtype(x.dtype).itemsize
    sub = _sublane_multiple(itemsize)

    if block_rows is None:
        # Budget per row: 2 double-buffered input rows + 2 output rows in the
        # input dtype, plus ~3 f32 temporaries (x cast / x*x / epilogue) that
        # live inside the kernel.  Keep the total well under v7x's 64 MiB.
        budget_bytes = 32 * 1024 * 1024
        per_row_bytes = 4 * N * itemsize + 3 * N * 4
        block_rows = max(sub, min(1024, budget_bytes // max(per_row_bytes, 1)))
    # Respect sublane packing.
    block_rows = max(sub, (block_rows // sub) * sub)
    # Don't make the tile larger than the (sublane-padded) batch.
    if block_rows > B:
        block_rows = ((B + sub - 1) // sub) * sub

    # Pad batch so B is a multiple of block_rows (padded rows are sliced off;
    # per-row reduction means padding never contaminates real rows).
    grid_rows = pl.cdiv(B, block_rows)
    B_pad = grid_rows * block_rows
    x_in = x if B_pad == B else jnp.pad(x, ((0, B_pad - B), (0, 0)))

    gain2d = gain.reshape(1, N)
    bias2d = bias.reshape(1, N)

    # VMEM limit sized to the tile (default scoped limit is well below
    # physical capacity); capped at 48 MiB so it stays legal on v7x.
    buf_bytes = block_rows * (4 * N * itemsize + 3 * N * 4) + 4 * N * 4
    vmem_limit = min(48 * 1024 * 1024, max(buf_bytes + (4 << 20), 32 << 20))

    kernel = functools.partial(_layernorm1d_kernel, eps=eps, n_feat=N)

    out = pl.pallas_call(
        kernel,
        out_shape=jax.ShapeDtypeStruct((B_pad, N), x.dtype),
        grid_spec=pltpu.PrefetchScalarGridSpec(
            num_scalar_prefetch=0,
            grid=(grid_rows,),
            in_specs=[
                pl.BlockSpec((block_rows, N), lambda i: (i, 0)),  # x rows
                pl.BlockSpec((1, N), lambda i: (0, 0)),           # gain (resident)
                pl.BlockSpec((1, N), lambda i: (0, 0)),           # bias (resident)
            ],
            out_specs=pl.BlockSpec((block_rows, N), lambda i: (i, 0)),
        ),
        compiler_params=pltpu.CompilerParams(
            # Row axis is fully independent -> shardable across v7x's 2 TCs
            # whenever the grid has >= 2 steps.
            dimension_semantics=("parallel",),
            vmem_limit_bytes=int(vmem_limit),
        ),
    )(x_in, gain2d, bias2d)

    return out if B_pad == B else out[:B]


def _reference(x, gain, bias, eps=1e-5):
    x = x.astype(jnp.float32)
    mean = jnp.mean(x, axis=1, keepdims=True)
    var = jnp.sum((x - mean) ** 2, axis=1, keepdims=True) / (x.shape[1] - 1)
    return gain * (x - mean) / jnp.sqrt(var + eps) + bias


if __name__ == "__main__":
    B, N = 16, 128   # batch rows, n_features
    key = jax.random.PRNGKey(0)
    x = jax.random.normal(key, (B, N), dtype=jnp.float32)

    # Deterministic parameter init, matching the module's __init__:
    gain = jnp.ones((N,), dtype=jnp.float32)
    bias = jnp.zeros((N,), dtype=jnp.float32)

    out = layernorm1d(x, gain, bias, eps=1e-5)
    out = jax.block_until_ready(out)

    ref = _reference(x, gain, bias)
    assert out.shape == (B, N)
    assert jnp.allclose(out, ref, atol=3e-5, rtol=3e-5), "mismatch vs reference"

    # Non-divisible batch path (padding + slice).
    B2 = 13
    x2 = jax.random.normal(jax.random.PRNGKey(1), (B2, N), dtype=jnp.float32)
    out2 = jax.block_until_ready(layernorm1d(x2, gain, bias, eps=1e-5))
    assert out2.shape == (B2, N)
    assert jnp.allclose(out2, _reference(x2, gain, bias), atol=3e-5, rtol=3e-5)

    # bf16 path (sublane packing = 16, f32 internal compute, cast at store).
    x3 = jax.random.normal(jax.random.PRNGKey(2), (B, N), dtype=jnp.bfloat16)
    out3 = jax.block_until_ready(
        layernorm1d(x3, gain.astype(jnp.bfloat16), bias.astype(jnp.bfloat16))
    )
    ref3 = _reference(x3.astype(jnp.float32), gain, bias)
    assert out3.shape == (B, N)
    assert jnp.allclose(out3.astype(jnp.float32), ref3, atol=5e-2, rtol=5e-2)

    print("KERNEL_OK")
</pallas_src>

<mosaic_0001>
module attributes {stable_mosaic.version = 11 : i64} {
  func.func @_layernorm1d_kernel(%arg0: i32, %arg1: memref<16x128xf32, #tpu.memory_space<vmem>>, %arg2: memref<1x128xf32, #tpu.memory_space<vmem>>, %arg3: memref<1x128xf32, #tpu.memory_space<vmem>>, %arg4: memref<16x128xf32, #tpu.memory_space<vmem>>) attributes {dimension_semantics = [#tpu.dimension_semantics<parallel>], iteration_bounds = array<i64: 1>, scalar_prefetch = 0 : i64, scratch_operands = 0 : i64, tpu.core_type = #tpu.core_type<tc>, window_params = [{transform_indices = @transform_0, window_bounds = array<i64: 16, 128>}, {pipeline_mode = #tpu.pipeline_mode<synchronous>, transform_indices = @transform_1, window_bounds = array<i64: 1, 128>}, {pipeline_mode = #tpu.pipeline_mode<synchronous>, transform_indices = @transform_2, window_bounds = array<i64: 1, 128>}, {transform_indices = @transform_3, window_bounds = array<i64: 16, 128>}]} {
    %c0 = arith.constant 0 : index
    %c0_0 = arith.constant 0 : index
    %0 = vector.load %arg1[%c0, %c0_0] : memref<16x128xf32, #tpu.memory_space<vmem>>, vector<16x128xf32>
    %cst = arith.constant dense<0.000000e+00> : vector<16xf32>
    %1 = vector.multi_reduction <add>, %0, %cst [1] : vector<16x128xf32> to vector<16xf32>
    %2 = vector.shape_cast %1 : vector<16xf32> to vector<16x1xf32>
    %3 = arith.mulf %0, %0 : vector<16x128xf32>
    %cst_1 = arith.constant dense<0.000000e+00> : vector<16xf32>
    %4 = vector.multi_reduction <add>, %3, %cst_1 [1] : vector<16x128xf32> to vector<16xf32>
    %5 = vector.shape_cast %4 : vector<16xf32> to vector<16x1xf32>
    %cst_2 = arith.constant 7.812500e-03 : f32
    %6 = vector.broadcast %cst_2 : f32 to vector<16x1xf32>
    %7 = arith.mulf %2, %6 : vector<16x1xf32>
    %8 = arith.mulf %2, %7 : vector<16x1xf32>
    %9 = arith.subf %5, %8 : vector<16x1xf32>
    %cst_3 = arith.constant 0.00787401571 : f32
    %10 = vector.broadcast %cst_3 : f32 to vector<16x1xf32>
    %11 = arith.mulf %9, %10 : vector<16x1xf32>
    %cst_4 = arith.constant 9.99999974E-6 : f32
    %12 = vector.broadcast %cst_4 : f32 to vector<16x1xf32>
    %13 = arith.addf %11, %12 : vector<16x1xf32>
    %14 = math.rsqrt %13 : vector<16x1xf32>
    %c0_5 = arith.constant 0 : index
    %c0_6 = arith.constant 0 : index
    %15 = vector.load %arg2[%c0_5, %c0_6] : memref<1x128xf32, #tpu.memory_space<vmem>>, vector<1x128xf32>
    %c0_7 = arith.constant 0 : index
    %c0_8 = arith.constant 0 : index
    %16 = vector.load %arg3[%c0_7, %c0_8] : memref<1x128xf32, #tpu.memory_space<vmem>>, vector<1x128xf32>
    %17 = vector.broadcast %7 : vector<16x1xf32> to vector<16x128xf32>
    %18 = arith.subf %0, %17 : vector<16x128xf32>
    %19 = vector.broadcast %14 : vector<16x1xf32> to vector<16x128xf32>
    %20 = arith.mulf %18, %19 : vector<16x128xf32>
    %21 = vector.broadcast %15 : vector<1x128xf32> to vector<16x128xf32>
    %22 = arith.mulf %21, %20 : vector<16x128xf32>
    %23 = vector.broadcast %16 : vector<1x128xf32> to vector<16x128xf32>
    %24 = arith.addf %22, %23 : vector<16x128xf32>
    %c0_9 = arith.constant 0 : index
    %c0_10 = arith.constant 0 : index
    %25 = vector.load %arg4[%c0_9, %c0_10] : memref<16x128xf32, #tpu.memory_space<vmem>>, vector<16x128xf32>
    tpu.vector_store %arg4[%c0_9, %c0_10], %24 {strides = array<i32>} : memref<16x128xf32, #tpu.memory_space<vmem>>, vector<16x128xf32>,
    return
  }
  func.func @transform_0(%arg0: i32) -> (i32, i32) {
    %c0_i32 = arith.constant 0 : i32
    %c0_i32_0 = arith.constant 0 : i32
    return %arg0, %c0_i32 : i32, i32
  }
  func.func @transform_1(%arg0: i32) -> (i32, i32) {
    %c0_i32 = arith.constant 0 : i32
    %c0_i32_0 = arith.constant 0 : i32
    %c0_i32_1 = arith.constant 0 : i32
    return %c0_i32, %c0_i32_0 : i32, i32
  }
  func.func @transform_2(%arg0: i32) -> (i32, i32) {
    %c0_i32 = arith.constant 0 : i32
    %c0_i32_0 = arith.constant 0 : i32
    %c0_i32_1 = arith.constant 0 : i32
    return %c0_i32, %c0_i32_0 : i32, i32
  }
  func.func @transform_3(%arg0: i32) -> (i32, i32) {
    %c0_i32 = arith.constant 0 : i32
    %c0_i32_0 = arith.constant 0 : i32
    return %arg0, %c0_i32 : i32, i32
  }
}

</mosaic_0001>

<llo_original>
// kernel: tpu_custom_call.1
$region0: #{tpu_custom_call.1}
  #allocation0 [shape = 'u32[]', space=smem, size = 0x4, offset = 0x4, fixed_abs, tag = 'smem constant byte address 0x4 - core index']
  #allocation1 [shape = 'u32[144,128]{1,0:T(1,128)}', space=vmem, size = 0x12000, scoped, tag = 'internal scratch']
  %s0 = inlined_call_operand.hbm [shape: f32[16,128], index: 0, kind: input, shape index: {}]
  %s1 = inlined_call_operand.vmem [shape: f32[1,128], index: 1, kind: input, shape index: {}]
  %s2 = inlined_call_operand.vmem [shape: f32[1,128], index: 2, kind: input, shape index: {}]
  %s3 = inlined_call_operand.hbm [shape: f32[16,128], index: 3, kind: output, shape index: {}]
  %s4 = sld [smem:[#allocation0]]
  $region26: #{tpu_custom_call.1} parent=0
    _
  %s6 = ssub.s32 1, %s4
  %s7 = scalar_select 0, %s6, %s4
  $region1: #{tpu_custom_call.1} parent=0
    #allocation2 [shape = 'u8[8192]{0}', space=vmem, size = 0x2000, scoped, tag = 'input window, operand 0, single buffered']
    #allocation3 [shape = 's32[1]{0}', space=sflag, size = 0x4, scoped, tag = 'scoped memory for tpu_custom_call.1']
    #allocation4 [shape = 's32[1]{0}', space=sflag, size = 0x4, scoped, tag = 'scoped memory for tpu_custom_call.1']
    #allocation5 [shape = 'u8[8192]{0}', space=vmem, size = 0x2000, scoped, tag = 'output window, operand 0, single buffered']
    %8 = vsyncpa [#allocation3], 0
    %9 = vsyncpa [#allocation4], 0
    // Predicated region
    $region2: #{tpu_custom_call.1} parent=1 // pred_check
      _
    $region3: #{tpu_custom_call.1} parent=1 // pred_check_branch
      %11 = sbr.rel (0) target = $region5
    $region4: #{tpu_custom_call.1} parent=1 // pred_region
      %s13 = ssub.s32 256, 256
      %14 = vsyncadd [#allocation3], %s13
      %s15 = sshll.u32 [#allocation2], 4
      %s16 = int_to_ptr.vmem [resolvable:$true] %s15
      %21 = dma.hbm_to_vmem [thread:$0]  %s0, 256, %s16, [#allocation3], 128, 128, 8
    $region5: #{tpu_custom_call.1} parent=1 // pred_fallthru
      _
    // Predicated region
    $region6: #{tpu_custom_call.1} parent=1 // pred_check
      _
    $region7: #{tpu_custom_call.1} parent=1 // pred_check_branch
      %23 = sbr.rel (0) target = $region9
    $region8: #{tpu_custom_call.1} parent=1 // pred_region
      _
    $region9: #{tpu_custom_call.1} parent=1 // pred_fallthru
      _
    // Predicated region
    $region10: #{tpu_custom_call.1} parent=1 // pred_check
      _
    $region11: #{tpu_custom_call.1} parent=1 // pred_check_branch
      %25 = sbr.rel (0) target = $region13
    $region12: #{tpu_custom_call.1} parent=1 // pred_region
      _
    $region13: #{tpu_custom_call.1} parent=1 // pred_fallthru
      _
    // Predicated region
    $region14: #{tpu_custom_call.1} parent=1 // pred_check
      _
    $region15: #{tpu_custom_call.1} parent=1 // pred_check_branch
      %27 = sbr.rel (0) target = $region17
    $region16: #{tpu_custom_call.1} parent=1 // pred_region
      %28 = dma.done [#allocation3], 256
    $region17: #{tpu_custom_call.1} parent=1 // pred_fallthru
      _
    %v29 = vld [vmem:[#allocation2] sm:$0xff]
    %v30 = vld [vmem:[#allocation2 + $0x8] sm:$0xff]
    %31 = vadd.xlane.f32.xlu0 %v29
    %v32 = vpop.xlane.xlu0 %31
    %33 = vadd.xlane.f32.xlu0 %v30
    %v34 = vpop.xlane.xlu0 %33
    %v35 = vmul.f32 %v29, %v29
    %v36 = vmul.f32 %v30, %v30
    %37 = vadd.xlane.f32.xlu0 %v35
    %v38 = vpop.xlane.xlu0 %37
    %39 = vadd.xlane.f32.xlu0 %v36
    %v40 = vpop.xlane.xlu0 %39
    %v41 = vmul.f32 %v32, 0.0078125
    %v42 = vmul.f32 %v34, 0.0078125
    %v43 = vmul.f32 %v32, %v41
    %v44 = vmul.f32 %v34, %v42
    %v45 = vsub.f32 %v38, %v43
    %v46 = vsub.f32 %v40, %v44
    %v47 = vmul.f32 %v45, 0.007874016
    %v48 = vmul.f32 %v46, 0.007874016
    %v49 = vadd.f32 %v47, 1e-05
    %v50 = vadd.f32 %v48, 1e-05
    %v51 = vrsqrt.pop %v49
    %v52 = vrsqrt.pop %v50
    %v53 = vld [vmem:[%s1] sm:$0x1]
    %v54 = vld [vmem:[%s2] sm:$0x1]
    %v55 = vsub.f32 %v29, %v41
    %v56 = vsub.f32 %v30, %v42
    %v57 = vmul.f32 %v55, %v51
    %v58 = vmul.f32 %v56, %v52
    %v60 = vlaneseq
    %v61 = vshrl.u32 %v60, 7
    %v62 = vsub.s32 0, %v61
    %v63 = vrot.slane %v53, %v62
    %v65 = vmul.f32 %v63, %v57
    %v66 = vmul.f32 %v63, %v58
    %v68 = vlaneseq
    %v69 = vshrl.u32 %v68, 7
    %v70 = vsub.s32 0, %v69
    %v71 = vrot.slane %v54, %v70
    %v73 = vadd.f32 %v65, %v71
    %v74 = vadd.f32 %v66, %v71
    %75 = vst [vmem:[#allocation5] sm:$0xff] %v73
    %76 = vst [vmem:[#allocation5 + $0x8] sm:$0xff] %v74
    // Predicated region
    $region18: #{tpu_custom_call.1} parent=1 // pred_check
      _
    $region19: #{tpu_custom_call.1} parent=1 // pred_check_branch
      %78 = sbr.rel (0) target = $region21
    $region20: #{tpu_custom_call.1} parent=1 // pred_region
      %s80 = ssub.s32 256, 256
      %81 = vsyncadd [#allocation4], %s80
      %s82 = sshll.u32 [#allocation5], 4
      %s83 = int_to_ptr.vmem [resolvable:$true] %s82
      %88 = dma.vmem_to_hbm [thread:$0]  %s83, 256, %s3, [#allocation4], 128, 128, 8
    $region21: #{tpu_custom_call.1} parent=1 // pred_fallthru
      _
    // Predicated region
    $region22: #{tpu_custom_call.1} parent=1 // pred_check
      _
    $region23: #{tpu_custom_call.1} parent=1 // pred_check_branch
      %90 = sbr.rel (0) target = $region25
    $region24: #{tpu_custom_call.1} parent=1 // pred_region
      %91 = dma.done [#allocation4], 256
    $region25: #{tpu_custom_call.1} parent=1 // pred_fallthru
      _
    %92 = vsyncpa [#allocation3], 1
    %93 = vsyncpa [#allocation4], 1

</llo_original>
